<compile_context>
chip_gen: v5e
topology: v5e:2x2
jax: 0.10.0
libtpu: 0.0.40
codegen_flags: <defaults>
</compile_context>

<pallas_src>
import functools

import jax
import jax.numpy as jnp
from jax.experimental import pallas as pl
from jax.experimental.pallas import tpu as pltpu

# Problem sizes (small, consistent with the module's conventions).
B, C_OUT, H, W = 2, 4, 16, 16      # fields are [B, 4, H, W]; last 2 ch = (Re, Im)
C_IN, HID = 3, 32                  # stand-in model input channels / hidden width
N = B * H * W                      # 512 pixels -> lane axis inside the kernel


# ----------------------------------------------------------------------------
# Single fused kernel: fwd MLP -> adjoint source -> adj MLP -> cal_grad.
# Layout: channels on sublanes, pixels (N) on lanes.
# ----------------------------------------------------------------------------
def _make_fused_kernel(use_predicted: bool):
    def kernel(x_ref, ez_ref,
               w1f_ref, b1f_ref, w2f_ref, b2f_ref,
               w1a_ref, b1a_ref, w2a_ref, b2a_ref,
               fwd_ri_ref, adj_ri_ref, adj_src_ref, grad_ref,
               xadj_ref):
        x = x_ref[...]                                            # [C_IN, N]

        # ---- forward solve (stand-in per-pixel MLP) ----
        # TODO(synk): the real model_fwd is an external network passed to
        # __init__; this deterministic MLP keeps the same tensor contract.
        h = jnp.dot(w1f_ref[...], x,
                    preferred_element_type=jnp.float32) + b1f_ref[...]   # [HID, N]
        h = jnp.maximum(h, 0.0)
        y_fwd = jnp.dot(w2f_ref[...], h,
                        preferred_element_type=jnp.float32) + b2f_ref[...]  # [C_OUT, N]

        fr = y_fwd[C_OUT - 2:C_OUT - 1, :]                        # [1, N] real
        fi = y_fwd[C_OUT - 1:C_OUT, :]                            # [1, N] imag
        fwd_ri_ref[...] = y_fwd[C_OUT - 2:C_OUT, :]               # fwd_field[:, -2:]

        # ---- adjoint source (stand-in for cal_total_field_adj_src_...) ----
        # TODO(synk): the real helper is an external MAPS function; stand-in:
        # adjoint source = real/imag swap of the chosen Ez field (.detach()
        # is applied in the wrapper).
        if use_predicted:            # epoch >= switch_epoch (static, like module)
            a0, a1 = fi, fr
        else:                        # use data['fwd_field'][:, -2:]
            a0 = ez_ref[1:2, :]
            a1 = ez_ref[0:1, :]
        adj_src_ref[0:1, :] = a0
        adj_src_ref[1:2, :] = a1

        # ---- adjoint solve: build [eps; adj_src] input in VMEM scratch ----
        xadj_ref[0:1, :] = x[0:1, :]
        xadj_ref[1:2, :] = a0
        xadj_ref[2:3, :] = a1
        xa = xadj_ref[...]                                        # [C_IN, N]

        h2 = jnp.dot(w1a_ref[...], xa,
                     preferred_element_type=jnp.float32) + b1a_ref[...]
        h2 = jnp.maximum(h2, 0.0)
        y_adj = jnp.dot(w2a_ref[...], h2,
                        preferred_element_type=jnp.float32) + b2a_ref[...]

        ar = y_adj[C_OUT - 2:C_OUT - 1, :]
        ai = y_adj[C_OUT - 1:C_OUT, :]
        adj_ri_ref[...] = y_adj[C_OUT - 2:C_OUT, :]               # adj_field[:, -2:]

        # cal_grad = Re((fr + i*fi) * (ar + i*ai))
        grad_ref[...] = fr * ar - fi * ai

    return kernel


def _fused_call(x_fwd, ez4adj, fwd_params, adj_params, *, use_predicted):
    inputs = (x_fwd, ez4adj) + tuple(fwd_params) + tuple(adj_params)
    vmem = lambda: pl.BlockSpec(memory_space=pltpu.MemorySpace.VMEM)
    return pl.pallas_call(
        _make_fused_kernel(use_predicted),
        out_shape=(
            jax.ShapeDtypeStruct((2, N), jnp.float32),   # fwd field (Re, Im)
            jax.ShapeDtypeStruct((2, N), jnp.float32),   # adj field (Re, Im)
            jax.ShapeDtypeStruct((2, N), jnp.float32),   # adjoint source
            jax.ShapeDtypeStruct((1, N), jnp.float32),   # cal_grad
        ),
        in_specs=[vmem() for _ in inputs],
        out_specs=(vmem(), vmem(), vmem(), vmem()),
        scratch_shapes=[pltpu.VMEM((C_IN, N), jnp.float32)],
    )(*inputs)


# ----------------------------------------------------------------------------
# dual_predictor.forward equivalent
# ----------------------------------------------------------------------------
@functools.partial(jax.jit, static_argnames=("use_predicted",))
def _dual_predictor_core(eps, src, ez4adj_ext, params, use_predicted):
    # Assemble the forward-solve input in lane-dense [C_IN, N] layout.
    x_fwd = jnp.concatenate(
        [eps.reshape(1, N),
         jnp.transpose(src, (1, 0, 2, 3)).reshape(2, N)], axis=0)

    fwd_ri, adj_ri, adj_src, grad = _fused_call(
        x_fwd, ez4adj_ext, params["fwd"], params["adj"],
        use_predicted=use_predicted)

    # view_as_complex of the permuted last-two channels (done on cheap slices).
    forward_field = jax.lax.complex(fwd_ri[0].reshape(B, H, W),
                                    fwd_ri[1].reshape(B, H, W))
    adjoint_field = jax.lax.complex(adj_ri[0].reshape(B, H, W),
                                    adj_ri[1].reshape(B, H, W))
    adjoint_source = jax.lax.stop_gradient(                       # .detach()
        jnp.transpose(adj_src.reshape(2, B, H, W), (1, 0, 2, 3)))
    cal_grad = grad.reshape(B, H, W)
    return forward_field, adjoint_field, adjoint_source, cal_grad


def dual_predictor_forward(data, params, epoch=1, switch_epoch=0):
    eps = data["eps_map"]                      # [B, H, W]
    src = data["src_profile"]                  # [B, 2, H, W]

    # Same static switch as the original module.
    use_predicted = epoch >= switch_epoch
    if use_predicted:
        ez4adj_ext = jnp.zeros((2, N), jnp.float32)     # unused by the kernel
    else:
        ff = data["fwd_field"][:, -2:, ...]             # [B, 2, H, W]
        ez4adj_ext = jnp.transpose(ff, (1, 0, 2, 3)).reshape(2, N)

    fwd_c, adj_c, adj_src, cal_grad = _dual_predictor_core(
        eps, src, ez4adj_ext, params, use_predicted)

    # TODO(synk): the matplotlib figure dumps and `quit()` in the original
    # forward are host-side I/O side effects and are intentionally omitted.
    return {
        "forward_field": fwd_c,
        "adjoint_field": adj_c,
        "adjoint_source": adj_src,
        "cal_grad": cal_grad,
    }


# ----------------------------------------------------------------------------
# Parameters (stand-in MLP weights, stored transposed: [out, in], bias [out,1])
# ----------------------------------------------------------------------------
def init_params(key):
    k1, k2, k3, k4 = jax.random.split(key, 4)

    def mlp(ka, kb):
        w1t = 0.1 * jax.random.normal(ka, (HID, C_IN), jnp.float32)   # W1^T
        b1 = jnp.zeros((HID, 1), jnp.float32)
        w2t = 0.1 * jax.random.normal(kb, (C_OUT, HID), jnp.float32)  # W2^T
        b2 = jnp.zeros((C_OUT, 1), jnp.float32)
        return (w1t, b1, w2t, b2)

    return {"fwd": mlp(k1, k2), "adj": mlp(k3, k4)}


# ----------------------------------------------------------------------------
# Pure-JAX reference (same stand-ins) for a numerical sanity check.
# ----------------------------------------------------------------------------
def _reference(data, params, epoch=1, switch_epoch=0):
    eps, src = data["eps_map"], data["src_profile"]

    def mlp(x_cn, p):
        w1t, b1, w2t, b2 = p
        h = jnp.maximum(w1t @ x_cn + b1, 0.0)
        return w2t @ h + b2

    x = jnp.concatenate(
        [eps.reshape(1, N), jnp.transpose(src, (1, 0, 2, 3)).reshape(2, N)], 0)
    y_fwd = mlp(x, params["fwd"])
    fr, fi = y_fwd[C_OUT - 2], y_fwd[C_OUT - 1]
    if epoch >= switch_epoch:
        a0, a1 = fi, fr
    else:
        ff = jnp.transpose(data["fwd_field"][:, -2:], (1, 0, 2, 3)).reshape(2, N)
        a0, a1 = ff[1], ff[0]
    xa = jnp.stack([x[0], a0, a1], 0)
    y_adj = mlp(xa, params["adj"])
    ar, ai = y_adj[C_OUT - 2], y_adj[C_OUT - 1]
    fwd_c = jax.lax.complex(fr.reshape(B, H, W), fi.reshape(B, H, W))
    adj_c = jax.lax.complex(ar.reshape(B, H, W), ai.reshape(B, H, W))
    adj_src = jnp.transpose(jnp.stack([a0, a1], 0).reshape(2, B, H, W),
                            (1, 0, 2, 3))
    grad = (fr * ar - fi * ai).reshape(B, H, W)
    return fwd_c, adj_c, adj_src, grad


if __name__ == "__main__":
    key = jax.random.PRNGKey(0)
    kp, k_eps, k_src, k_ff = jax.random.split(key, 4)

    params = init_params(kp)
    data = {
        "eps_map": jax.random.uniform(k_eps, (B, H, W), jnp.float32) + 1.0,
        "src_profile": jax.random.normal(k_src, (B, 2, H, W), jnp.float32),
        "fwd_field": jax.random.normal(k_ff, (B, C_OUT, H, W), jnp.float32),
        "wavelength": 1.55,
        "mode": 1,
        "temp": 300.0,
        "input_slice": "in_slice_1",
    }

    out = dual_predictor_forward(data, params, epoch=1, switch_epoch=0)
    jax.block_until_ready(out)

    assert out["forward_field"].shape == (B, H, W)
    assert out["adjoint_field"].shape == (B, H, W)
    assert out["adjoint_source"].shape == (B, 2, H, W)
    assert out["cal_grad"].shape == (B, H, W)

    ref_fwd, ref_adj, ref_src, ref_grad = _reference(
        data, params, epoch=1, switch_epoch=0)
    assert jnp.allclose(out["forward_field"], ref_fwd, rtol=1e-2, atol=1e-3)
    assert jnp.allclose(out["adjoint_field"], ref_adj, rtol=1e-2, atol=1e-3)
    assert jnp.allclose(out["adjoint_source"], ref_src, rtol=1e-2, atol=1e-3)
    assert jnp.allclose(out["cal_grad"], ref_grad, rtol=1e-2, atol=1e-3)

    print("KERNEL_OK")
</pallas_src>

<mosaic_0001>
module attributes {stable_mosaic.version = 11 : i64} {
  func.func @kernel(%arg0: memref<3x512xf32, #tpu.memory_space<vmem>>, %arg1: memref<2x512xf32, #tpu.memory_space<vmem>>, %arg2: memref<32x3xf32, #tpu.memory_space<vmem>>, %arg3: memref<32x1xf32, #tpu.memory_space<vmem>>, %arg4: memref<4x32xf32, #tpu.memory_space<vmem>>, %arg5: memref<4x1xf32, #tpu.memory_space<vmem>>, %arg6: memref<32x3xf32, #tpu.memory_space<vmem>>, %arg7: memref<32x1xf32, #tpu.memory_space<vmem>>, %arg8: memref<4x32xf32, #tpu.memory_space<vmem>>, %arg9: memref<4x1xf32, #tpu.memory_space<vmem>>, %arg10: memref<2x512xf32, #tpu.memory_space<vmem>>, %arg11: memref<2x512xf32, #tpu.memory_space<vmem>>, %arg12: memref<2x512xf32, #tpu.memory_space<vmem>>, %arg13: memref<1x512xf32, #tpu.memory_space<vmem>>, %arg14: memref<3x512xf32, #tpu.memory_space<vmem>>) attributes {dimension_semantics = [], scalar_prefetch = 0 : i64, scratch_operands = 1 : i64, tpu.core_type = #tpu.core_type<tc>} {
    %c0 = arith.constant 0 : index
    %c0_0 = arith.constant 0 : index
    %0 = vector.load %arg0[%c0, %c0_0] : memref<3x512xf32, #tpu.memory_space<vmem>>, vector<3x512xf32>
    %c0_1 = arith.constant 0 : index
    %c0_2 = arith.constant 0 : index
    %1 = vector.load %arg2[%c0_1, %c0_2] : memref<32x3xf32, #tpu.memory_space<vmem>>, vector<32x3xf32>
    %cst = arith.constant dense<0.000000e+00> : vector<32x512xf32>
    %2 = tpu.matmul %1, %0, %cst {dimension_numbers = #tpu.dot_dimension_numbers<[1], [0], [0], [1], [0, 0, 1, 1], [], []>} : vector<32x3xf32>, vector<3x512xf32>, vector<32x512xf32> -> vector<32x512xf32>
    %c0_3 = arith.constant 0 : index
    %c0_4 = arith.constant 0 : index
    %3 = vector.load %arg3[%c0_3, %c0_4] : memref<32x1xf32, #tpu.memory_space<vmem>>, vector<32x1xf32>
    %4 = vector.broadcast %3 : vector<32x1xf32> to vector<32x512xf32>
    %5 = arith.addf %2, %4 : vector<32x512xf32>
    %cst_5 = arith.constant 0.000000e+00 : f32
    %6 = vector.broadcast %cst_5 : f32 to vector<32x512xf32>
    %7 = arith.maximumf %5, %6 : vector<32x512xf32>
    %c0_6 = arith.constant 0 : index
    %c0_7 = arith.constant 0 : index
    %8 = vector.load %arg4[%c0_6, %c0_7] : memref<4x32xf32, #tpu.memory_space<vmem>>, vector<4x32xf32>
    %cst_8 = arith.constant dense<0.000000e+00> : vector<4x512xf32>
    %9 = tpu.matmul %8, %7, %cst_8 {dimension_numbers = #tpu.dot_dimension_numbers<[1], [0], [0], [1], [0, 0, 1, 1], [], []>} : vector<4x32xf32>, vector<32x512xf32>, vector<4x512xf32> -> vector<4x512xf32>
    %c0_9 = arith.constant 0 : index
    %c0_10 = arith.constant 0 : index
    %10 = vector.load %arg5[%c0_9, %c0_10] : memref<4x1xf32, #tpu.memory_space<vmem>>, vector<4x1xf32>
    %11 = vector.broadcast %10 : vector<4x1xf32> to vector<4x512xf32>
    %12 = arith.addf %9, %11 : vector<4x512xf32>
    %13 = vector.extract_strided_slice %12 {offsets = [2, 0], sizes = [1, 512], strides = [1, 1]} : vector<4x512xf32> to vector<1x512xf32>
    %14 = vector.extract_strided_slice %12 {offsets = [3, 0], sizes = [1, 512], strides = [1, 1]} : vector<4x512xf32> to vector<1x512xf32>
    %15 = vector.extract_strided_slice %12 {offsets = [2, 0], sizes = [2, 512], strides = [1, 1]} : vector<4x512xf32> to vector<2x512xf32>
    %c0_11 = arith.constant 0 : index
    %c0_12 = arith.constant 0 : index
    %16 = vector.load %arg10[%c0_11, %c0_12] : memref<2x512xf32, #tpu.memory_space<vmem>>, vector<2x512xf32>
    tpu.vector_store %arg10[%c0_11, %c0_12], %15 {strides = array<i32>} : memref<2x512xf32, #tpu.memory_space<vmem>>, vector<2x512xf32>,
    %c0_13 = arith.constant 0 : index
    %c0_14 = arith.constant 0 : index
    %17 = vector.load %arg12[%c0_13, %c0_14] : memref<2x512xf32, #tpu.memory_space<vmem>>, vector<1x512xf32>
    tpu.vector_store %arg12[%c0_13, %c0_14], %14 {strides = array<i32>} : memref<2x512xf32, #tpu.memory_space<vmem>>, vector<1x512xf32>,
    %c1 = arith.constant 1 : index
    %c0_15 = arith.constant 0 : index
    %18 = vector.load %arg12[%c1, %c0_15] : memref<2x512xf32, #tpu.memory_space<vmem>>, vector<1x512xf32>
    tpu.vector_store %arg12[%c1, %c0_15], %13 {strides = array<i32>} : memref<2x512xf32, #tpu.memory_space<vmem>>, vector<1x512xf32>,
    %19 = vector.extract_strided_slice %0 {offsets = [0, 0], sizes = [1, 512], strides = [1, 1]} : vector<3x512xf32> to vector<1x512xf32>
    %c0_16 = arith.constant 0 : index
    %c0_17 = arith.constant 0 : index
    %20 = vector.load %arg14[%c0_16, %c0_17] : memref<3x512xf32, #tpu.memory_space<vmem>>, vector<1x512xf32>
    tpu.vector_store %arg14[%c0_16, %c0_17], %19 {strides = array<i32>} : memref<3x512xf32, #tpu.memory_space<vmem>>, vector<1x512xf32>,
    %c1_18 = arith.constant 1 : index
    %c0_19 = arith.constant 0 : index
    %21 = vector.load %arg14[%c1_18, %c0_19] : memref<3x512xf32, #tpu.memory_space<vmem>>, vector<1x512xf32>
    tpu.vector_store %arg14[%c1_18, %c0_19], %14 {strides = array<i32>} : memref<3x512xf32, #tpu.memory_space<vmem>>, vector<1x512xf32>,
    %c2 = arith.constant 2 : index
    %c0_20 = arith.constant 0 : index
    %22 = vector.load %arg14[%c2, %c0_20] : memref<3x512xf32, #tpu.memory_space<vmem>>, vector<1x512xf32>
    tpu.vector_store %arg14[%c2, %c0_20], %13 {strides = array<i32>} : memref<3x512xf32, #tpu.memory_space<vmem>>, vector<1x512xf32>,
    %c0_21 = arith.constant 0 : index
    %c0_22 = arith.constant 0 : index
    %23 = vector.load %arg14[%c0_21, %c0_22] : memref<3x512xf32, #tpu.memory_space<vmem>>, vector<3x512xf32>
    %c0_23 = arith.constant 0 : index
    %c0_24 = arith.constant 0 : index
    %24 = vector.load %arg6[%c0_23, %c0_24] : memref<32x3xf32, #tpu.memory_space<vmem>>, vector<32x3xf32>
    %cst_25 = arith.constant dense<0.000000e+00> : vector<32x512xf32>
    %25 = tpu.matmul %24, %23, %cst_25 {dimension_numbers = #tpu.dot_dimension_numbers<[1], [0], [0], [1], [0, 0, 1, 1], [], []>} : vector<32x3xf32>, vector<3x512xf32>, vector<32x512xf32> -> vector<32x512xf32>
    %c0_26 = arith.constant 0 : index
    %c0_27 = arith.constant 0 : index
    %26 = vector.load %arg7[%c0_26, %c0_27] : memref<32x1xf32, #tpu.memory_space<vmem>>, vector<32x1xf32>
    %27 = vector.broadcast %26 : vector<32x1xf32> to vector<32x512xf32>
    %28 = arith.addf %25, %27 : vector<32x512xf32>
    %cst_28 = arith.constant 0.000000e+00 : f32
    %29 = vector.broadcast %cst_28 : f32 to vector<32x512xf32>
    %30 = arith.maximumf %28, %29 : vector<32x512xf32>
    %c0_29 = arith.constant 0 : index
    %c0_30 = arith.constant 0 : index
    %31 = vector.load %arg8[%c0_29, %c0_30] : memref<4x32xf32, #tpu.memory_space<vmem>>, vector<4x32xf32>
    %cst_31 = arith.constant dense<0.000000e+00> : vector<4x512xf32>
    %32 = tpu.matmul %31, %30, %cst_31 {dimension_numbers = #tpu.dot_dimension_numbers<[1], [0], [0], [1], [0, 0, 1, 1], [], []>} : vector<4x32xf32>, vector<32x512xf32>, vector<4x512xf32> -> vector<4x512xf32>
    %c0_32 = arith.constant 0 : index
    %c0_33 = arith.constant 0 : index
    %33 = vector.load %arg9[%c0_32, %c0_33] : memref<4x1xf32, #tpu.memory_space<vmem>>, vector<4x1xf32>
    %34 = vector.broadcast %33 : vector<4x1xf32> to vector<4x512xf32>
    %35 = arith.addf %32, %34 : vector<4x512xf32>
    %36 = vector.extract_strided_slice %35 {offsets = [2, 0], sizes = [1, 512], strides = [1, 1]} : vector<4x512xf32> to vector<1x512xf32>
    %37 = vector.extract_strided_slice %35 {offsets = [3, 0], sizes = [1, 512], strides = [1, 1]} : vector<4x512xf32> to vector<1x512xf32>
    %38 = vector.extract_strided_slice %35 {offsets = [2, 0], sizes = [2, 512], strides = [1, 1]} : vector<4x512xf32> to vector<2x512xf32>
    %c0_34 = arith.constant 0 : index
    %c0_35 = arith.constant 0 : index
    %39 = vector.load %arg11[%c0_34, %c0_35] : memref<2x512xf32, #tpu.memory_space<vmem>>, vector<2x512xf32>
    tpu.vector_store %arg11[%c0_34, %c0_35], %38 {strides = array<i32>} : memref<2x512xf32, #tpu.memory_space<vmem>>, vector<2x512xf32>,
    %40 = arith.mulf %13, %36 : vector<1x512xf32>
    %41 = arith.mulf %14, %37 : vector<1x512xf32>
    %42 = arith.subf %40, %41 : vector<1x512xf32>
    %c0_36 = arith.constant 0 : index
    %c0_37 = arith.constant 0 : index
    %43 = vector.load %arg13[%c0_36, %c0_37] : memref<1x512xf32, #tpu.memory_space<vmem>>, vector<1x512xf32>
    tpu.vector_store %arg13[%c0_36, %c0_37], %42 {strides = array<i32>} : memref<1x512xf32, #tpu.memory_space<vmem>>, vector<1x512xf32>,
    return
  }
}

</mosaic_0001>

<llo_original>
// kernel: squeeze.6
$region0: #{squeeze.6}
  %s0 = inlined_call_operand.vmem [shape: f32[512], index: 0, kind: input, shape index: {}]
  %s1 = inlined_call_operand.vmem [shape: f32[2,16,16], index: 1, kind: output, shape index: {}]
  $region1: #{squeeze.6} parent=0
    #allocation0 [shape = 'u8[4096]{0}', space=vmem, size = 0x1000, scoped, tag = 'scoped mem for input reshape']
    %s3 = ssub.s32 16, 1
    %v4 = vld [vmem:[%s0] sm:%s3]
    %5 = vst [vmem:[#allocation0] sm:%s3] %v4
    %v6 = vld [vmem:[#allocation0] sm:$0xf]
    %vm7 = vcmask 130048
    %8 = vst.msk [vmem:[%s1] ss:$8 sm:$0xf] %vm7, %v6
    %v9 = vld [vmem:[#allocation0] sm:$0xf]
    %10 = vrot.lane.b32.xlu0 %v9, 112
    %v11 = vpop.permute.xlu0 %10
    %vm12 = vcmask 130048
    %s13 = scalar_lea.vmem %s1, 1
    %14 = vst.msk [vmem:[%s13] ss:$8 sm:$0xf] %vm12, %v11
    %v15 = vld [vmem:[#allocation0] sm:$0xf]
    %16 = vrot.lane.b32.xlu0 %v15, 96
    %v17 = vpop.permute.xlu0 %16
    %vm18 = vcmask 130048
    %s19 = scalar_lea.vmem %s1, 2
    %20 = vst.msk [vmem:[%s19] ss:$8 sm:$0xf] %vm18, %v17
    %v21 = vld [vmem:[#allocation0] sm:$0xf]
    %22 = vrot.lane.b32.xlu0 %v21, 80
    %v23 = vpop.permute.xlu0 %22
    %vm24 = vcmask 130048
    %s25 = scalar_lea.vmem %s1, 3
    %26 = vst.msk [vmem:[%s25] ss:$8 sm:$0xf] %vm24, %v23
    %v27 = vld [vmem:[#allocation0] sm:$0xf]
    %28 = vrot.lane.b32.xlu0 %v27, 64
    %v29 = vpop.permute.xlu0 %28
    %vm30 = vcmask 130048
    %s31 = scalar_lea.vmem %s1, 4
    %32 = vst.msk [vmem:[%s31] ss:$8 sm:$0xf] %vm30, %v29
    %v33 = vld [vmem:[#allocation0] sm:$0xf]
    %34 = vrot.lane.b32.xlu0 %v33, 48
    %v35 = vpop.permute.xlu0 %34
    %vm36 = vcmask 130048
    %s37 = scalar_lea.vmem %s1, 5
    %38 = vst.msk [vmem:[%s37] ss:$8 sm:$0xf] %vm36, %v35
    %v39 = vld [vmem:[#allocation0] sm:$0xf]
    %40 = vrot.lane.b32.xlu0 %v39, 32
    %v41 = vpop.permute.xlu0 %40
    %vm42 = vcmask 130048
    %s43 = scalar_lea.vmem %s1, 6
    %44 = vst.msk [vmem:[%s43] ss:$8 sm:$0xf] %vm42, %v41
    %v45 = vld [vmem:[#allocation0] sm:$0xf]
    %46 = vrot.lane.b32.xlu0 %v45, 16
    %v47 = vpop.permute.xlu0 %46
    %vm48 = vcmask 130048
    %s49 = scalar_lea.vmem %s1, 7
    %50 = vst.msk [vmem:[%s49] ss:$8 sm:$0xf] %vm48, %v47

// kernel: custom-call.1
$region0: #{custom-call.1}
  %s0 = inlined_call_operand.vmem [shape: f32[2,16,16], index: 0, kind: input, shape index: {}]
  %s1 = inlined_call_operand.vmem [shape: f32[2,16,16], index: 1, kind: input, shape index: {}]
  %s2 = inlined_call_operand.hbm [shape: c64[2,16,16], index: 2, kind: output, shape index: {}]
  %s3 = scalar_lea.hbm %s2, 32
  $region1: #{custom-call.1} parent=0
    #allocation0 [shape = 's32[1]{0}', space=sflag, size = 0x4, scoped, tag = 'scoped memory for custom-call.1']
    %4 = vsyncpa [#allocation0], 0
    %s6 = sshll.u32 %s0, 4
    %s7 = int_to_ptr.vmem [resolvable:$true] %s6
    %s8 = sshll.u32 %s2, 4
    %s9 = int_to_ptr.hbm [resolvable:$true] %s8
    %11 = dma.vmem_to_hbm [thread:$0]  %s7, 512, %s9, [#allocation0]
    %13 = dma.done [#allocation0], 512
    %14 = vsyncpa [#allocation0], 1
  $region2: #{custom-call.1} parent=0
    #allocation1 [shape = 's32[1]{0}', space=sflag, size = 0x4, scoped, tag = 'scoped memory for custom-call.1']
    %15 = vsyncpa [#allocation1], 0
    %s17 = sshll.u32 %s1, 4
    %s18 = int_to_ptr.vmem [resolvable:$true] %s17
    %s19 = sshll.u32 %s3, 4
    %s20 = int_to_ptr.hbm [resolvable:$true] %s19
    %22 = dma.vmem_to_hbm [thread:$0]  %s18, 512, %s20, [#allocation1]
    %24 = dma.done [#allocation1], 512
    %25 = vsyncpa [#allocation1], 1

// kernel: _dual_predictor_core.1
$region0: #{_dual_predictor_core.1}
  #allocation0 [shape = 'u32[]', space=smem, size = 0x4, offset = 0x4, fixed_abs, tag = 'smem constant byte address 0x4 - core index']
  #allocation1 [shape = 'u32[72,128]{1,0:T(1,128)}', space=vmem, size = 0x9000, scoped, tag = 'internal scratch']
  #allocation2 [shape = 'f32[3,512]{1,0:T(4,128)}', space=vmem, size = 0x2000, scoped, tag = 'scratch operand']
  %s0 = inlined_call_operand.vmem [shape: f32[3,512], index: 0, kind: input, shape index: {}]
  %s1 = inlined_call_operand.vmem [shape: f32[2,512], index: 1, kind: input, shape index: {}]
  %s2 = inlined_call_operand.vmem [shape: f32[32,3], index: 2, kind: input, shape index: {}]
  %s3 = inlined_call_operand.vmem [shape: f32[32,1], index: 3, kind: input, shape index: {}]
  %s4 = inlined_call_operand.vmem [shape: f32[4,32], index: 4, kind: input, shape index: {}]
  %s5 = inlined_call_operand.vmem [shape: f32[4,1], index: 5, kind: input, shape index: {}]
  %s6 = inlined_call_operand.vmem [shape: f32[32,3], index: 6, kind: input, shape index: {}]
  %s7 = inlined_call_operand.vmem [shape: f32[32,1], index: 7, kind: input, shape index: {}]
  %s8 = inlined_call_operand.vmem [shape: f32[4,32], index: 8, kind: input, shape index: {}]
  %s9 = inlined_call_operand.vmem [shape: f32[4,1], index: 9, kind: input, shape index: {}]
  %s10 = inlined_call_operand.vmem [shape: f32[2,512], index: 10, kind: output, shape index: {0}]
  %s11 = inlined_call_operand.vmem [shape: f32[2,512], index: 11, kind: output, shape index: {1}]
  %s12 = inlined_call_operand.vmem [shape: f32[2,512], index: 12, kind: output, shape index: {2}]
  %s13 = inlined_call_operand.vmem [shape: f32[1,512], index: 13, kind: output, shape index: {3}]
  %14 = xla_tuple %s10, %s11, %s12, %s13
  %s15 = sld [smem:[#allocation0]]
  $region74: #{_dual_predictor_core.1} parent=0
    _
  %s17 = ssub.s32 1, %s15
  %s18 = scalar_select 0, %s17, %s15
  // Predicated region
  $region2: #{_dual_predictor_core.1} parent=0 // pred_check
    _
  $region3: #{_dual_predictor_core.1} parent=0 // pred_check_branch
    %20 = sbr.rel (0) target = $region5
  $region4: #{_dual_predictor_core.1} parent=0 // pred_region
    _
  $region5: #{_dual_predictor_core.1} parent=0 // pred_fallthru
    _
  // Predicated region
  $region6: #{_dual_predictor_core.1} parent=0 // pred_check
    _
  $region7: #{_dual_predictor_core.1} parent=0 // pred_check_branch
    %22 = sbr.rel (0) target = $region9
  $region8: #{_dual_predictor_core.1} parent=0 // pred_region
    _
  $region9: #{_dual_predictor_core.1} parent=0 // pred_fallthru
    _
  // Predicated region
  $region10: #{_dual_predictor_core.1} parent=0 // pred_check
    _
  $region11: #{_dual_predictor_core.1} parent=0 // pred_check_branch
    %24 = sbr.rel (0) target = $region13
  $region12: #{_dual_predictor_core.1} parent=0 // pred_region
    _
  $region13: #{_dual_predictor_core.1} parent=0 // pred_fallthru
    _
  // Predicated region
  $region14: #{_dual_predictor_core.1} parent=0 // pred_check
    _
  $region15: #{_dual_predictor_core.1} parent=0 // pred_check_branch
    %26 = sbr.rel (0) target = $region17
  $region16: #{_dual_predictor_core.1} parent=0 // pred_region
    _
  $region17: #{_dual_predictor_core.1} parent=0 // pred_fallthru
    _
  // Predicated region
  $region18: #{_dual_predictor_core.1} parent=0 // pred_check
    _
  $region19: #{_dual_predictor_core.1} parent=0 // pred_check_branch
    %28 = sbr.rel (0) target = $region21
  $region20: #{_dual_predictor_core.1} parent=0 // pred_region
    _
  $region21: #{_dual_predictor_core.1} parent=0 // pred_fallthru
    _
  // Predicated region
  $region22: #{_dual_predictor_core.1} parent=0 // pred_check
    _
  $region23: #{_dual_predictor_core.1} parent=0 // pred_check_branch
    %30 = sbr.rel (0) target = $region25
  $region24: #{_dual_predictor_core.1} parent=0 // pred_region
    _
  $region25: #{_dual_predictor_core.1} parent=0 // pred_fallthru
    _
  // Predicated region
  $region26: #{_dual_predictor_core.1} parent=0 // pred_check
    _
  $region27: #{_dual_predictor_core.1} parent=0 // pred_check_branch
    %32 = sbr.rel (0) target = $region29
  $region28: #{_dual_predictor_core.1} parent=0 // pred_region
    _
  $region29: #{_dual_predictor_core.1} parent=0 // pred_fallthru
    _
  // Predicated region
  $region30: #{_dual_predictor_core.1} parent=0 // pred_check
    _
  $region31: #{_dual_predictor_core.1} parent=0 // pred_check_branch
    %34 = sbr.rel (0) target = $region33
  $region32: #{_dual_predictor_core.1} parent=0 // pred_region
    _
  $region33: #{_dual_predictor_core.1} parent=0 // pred_fallthru
    _
  // Predicated region
  $region34: #{_dual_predictor_core.1} parent=0 // pred_check
    _
  $region35: #{_dual_predictor_core.1} parent=0 // pred_check_branch
    %36 = sbr.rel (0) target = $region37
  $region36: #{_dual_predictor_core.1} parent=0 // pred_region
    _
  $region37: #{_dual_predictor_core.1} parent=0 // pred_fallthru
    _
  // Predicated region
  $region38: #{_dual_predictor_core.1} parent=0 // pred_check
    _
  $region39: #{_dual_predictor_core.1} parent=0 // pred_check_branch
    %38 = sbr.rel (0) target = $region41
  $region40: #{_dual_predictor_core.1} parent=0 // pred_region
    _
  $region41: #{_dual_predictor_core.1} parent=0 // pred_fallthru
    _
  %v39 = vld [vmem:[%s0] sm:$0x77]
  %v40 = vld [vmem:[%s0 + $0x8] sm:$0x77]
  %v41 = vld [vmem:[%s2] sm:$0xff]
  %v42 = vld [vmem:[%s2 + $0x8] sm:$0xff]
  %v43 = vld [vmem:[%s2 + $0x10] sm:$0xff]
  %v44 = vld [vmem:[%s2 + $0x18] sm:$0xff]
  %v45 = vld [vmem:[%s3] sm:$0xff]
  %v46 = vld [vmem:[%s3 + $0x8] sm:$0xff]
  %v47 = vld [vmem:[%s3 + $0x10] sm:$0xff]
  %v48 = vld [vmem:[%s3 + $0x18] sm:$0xff]
  %50 = vset.pattern.permute.xlu0 0
  %51 = vperm.xlu0 %50, %v45
  %v52 = vpop.permute.xlu0 %51
  %55 = vset.pattern.permute.xlu0 0
  %56 = vperm.xlu0 %55, %v46
  %v57 = vpop.permute.xlu0 %56
  %60 = vset.pattern.permute.xlu0 0
  %61 = vperm.xlu0 %60, %v47
  %v62 = vpop.permute.xlu0 %61
  %65 = vset.pattern.permute.xlu0 0
  %66 = vperm.xlu0 %65, %v48
  %v67 = vpop.permute.xlu0 %66
  %71 = vst [vmem:[#allocation1] ss:$2 sm:$0xff] %v39
  %s72 = scalar_lea.vmem [#allocation1], 16
  %73 = vst [vmem:[%s72] ss:$2 sm:$0xff] %v40
  %v74 = vld.sshfl [vmem:[#allocation1] sm:$0xff pattern:$0x75316420]
  %v75 = vld.sshfl [vmem:[#allocation1 + $0x8] sm:$0xff pattern:$0x75316420]
  %v76 = vld.sshfl [vmem:[#allocation1 + $0x10] sm:$0xff pattern:$0x75316420]
  %v77 = vld.sshfl [vmem:[#allocation1 + $0x18] sm:$0xff pattern:$0x75316420]
  %vm78 = vcmask 23552
  %v80 = vsel %vm78, %v41, 0
  %v83 = vsel %vm78, %v42, 0
  %v86 = vsel %vm78, %v43, 0
  %v89 = vsel %vm78, %v44, 0
  %vm91 = vcmask 1042432
  %v92 = vsel %vm91, %v74, 0
  %v94 = vsel %vm91, %v75, 0
  %v96 = vsel %vm91, %v76, 0
  %v98 = vsel %vm91, %v77, 0
  %100 = vmatpush.msra.mxu0 0.0
  %101 = vmatpush.msra.mxu0 0.0
  %102 = vmatpush.msra.mxu0 0.0
  %103 = vmatpush.msra.mxu0 0.0
  %104 = vmatpush.msra.mxu0 0.0
  %105 = vmatpush.msra.mxu0 0.0
  %106 = vmatpush.msra.mxu0 0.0
  %107 = vmatpush.msra.mxu0 0.0
  %108 = vmatpush.msra.mxu0 0.0
  %109 = vmatpush.msra.mxu0 0.0
  %110 = vmatpush.msra.mxu0 0.0
  %111 = vmatpush.msra.mxu0 0.0
  %112 = vmatpush.msra.mxu0 0.0
  %113 = vmatpush.msra.mxu0 0.0
  %114 = vmatpush.msra.mxu0 0.0
  %115 = vmatpush.msra.mxu0 %v92
  %116 = vmatmul.f32.gmra.mxu0 %v80
  %v117 = vpop.f32.mrf.mxu0
  %v118 = vadd.f32 %v52, %v117
  %119 = vmatmul.f32.gmra.mxu0 %v83
  %v120 = vpop.f32.mrf.mxu0
  %v121 = vadd.f32 %v57, %v120
  %122 = vmatmul.f32.gmra.mxu0 %v86
  %v123 = vpop.f32.mrf.mxu0
  %v124 = vadd.f32 %v62, %v123
  %125 = vmatmul.f32.gmra.mxu0 %v89
  %v126 = vpop.f32.mrf.mxu0
  %v127 = vadd.f32 %v67, %v126
  %128 = vdwg.mxu0
  %129 = vmatpush.msra.mxu0 0.0
  %130 = vmatpush.msra.mxu0 0.0
  %131 = vmatpush.msra.mxu0 0.0
  %132 = vmatpush.msra.mxu0 0.0
  %133 = vmatpush.msra.mxu0 0.0
  %134 = vmatpush.msra.mxu0 0.0
  %135 = vmatpush.msra.mxu0 0.0
  %136 = vmatpush.msra.mxu0 0.0
  %137 = vmatpush.msra.mxu0 0.0
  %138 = vmatpush.msra.mxu0 0.0
  %139 = vmatpush.msra.mxu0 0.0
  %140 = vmatpush.msra.mxu0 0.0
  %141 = vmatpush.msra.mxu0 0.0
  %142 = vmatpush.msra.mxu0 0.0
  %143 = vmatpush.msra.mxu0 0.0
  %144 = vmatpush.msra.mxu0 %v94
  %145 = vmatmul.f32.gmra.mxu0 %v80
  %v146 = vpop.f32.mrf.mxu0
  %v147 = vadd.f32 %v52, %v146
  %148 = vmatmul.f32.gmra.mxu0 %v83
  %v149 = vpop.f32.mrf.mxu0
  %v150 = vadd.f32 %v57, %v149
  %151 = vmatmul.f32.gmra.mxu0 %v86
  %v152 = vpop.f32.mrf.mxu0
  %v153 = vadd.f32 %v62, %v152
  %154 = vmatmul.f32.gmra.mxu0 %v89
  %v155 = vpop.f32.mrf.mxu0
  %v156 = vadd.f32 %v67, %v155
  %157 = vdwg.mxu0
  %158 = vmatpush.msra.mxu0 0.0
  %159 = vmatpush.msra.mxu0 0.0
  %160 = vmatpush.msra.mxu0 0.0
  %161 = vmatpush.msra.mxu0 0.0
  %162 = vmatpush.msra.mxu0 0.0
  %163 = vmatpush.msra.mxu0 0.0
  %164 = vmatpush.msra.mxu0 0.0
  %165 = vmatpush.msra.mxu0 0.0
  %166 = vmatpush.msra.mxu0 0.0
  %167 = vmatpush.msra.mxu0 0.0
  %168 = vmatpush.msra.mxu0 0.0
  %169 = vmatpush.msra.mxu0 0.0
  %170 = vmatpush.msra.mxu0 0.0
  %171 = vmatpush.msra.mxu0 0.0
  %172 = vmatpush.msra.mxu0 0.0
  %173 = vmatpush.msra.mxu0 %v96
  %174 = vmatmul.f32.gmra.mxu0 %v80
  %v175 = vpop.f32.mrf.mxu0
  %v176 = vadd.f32 %v52, %v175
  %177 = vmatmul.f32.gmra.mxu0 %v83
  %v178 = vpop.f32.mrf.mxu0
  %v179 = vadd.f32 %v57, %v178
  %180 = vmatmul.f32.gmra.mxu0 %v86
  %v181 = vpop.f32.mrf.mxu0
  %v182 = vadd.f32 %v62, %v181
  %183 = vmatmul.f32.gmra.mxu0 %v89
  %v184 = vpop.f32.mrf.mxu0
  %v185 = vadd.f32 %v67, %v184
  %186 = vdwg.mxu0
  %187 = vmatpush.msra.mxu0 0.0
  %188 = vmatpush.msra.mxu0 0.0
  %189 = vmatpush.msra.mxu0 0.0
  %190 = vmatpush.msra.mxu0 0.0
  %191 = vmatpush.msra.mxu0 0.0
  %192 = vmatpush.msra.mxu0 0.0
  %193 = vmatpush.msra.mxu0 0.0
  %194 = vmatpush.msra.mxu0 0.0
  %195 = vmatpush.msra.mxu0 0.0
  %196 = vmatpush.msra.mxu0 0.0
  %197 = vmatpush.msra.mxu0 0.0
  %198 = vmatpush.msra.mxu0 0.0
  %199 = vmatpush.msra.mxu0 0.0
  %200 = vmatpush.msra.mxu0 0.0
  %201 = vmatpush.msra.mxu0 0.0
  %202 = vmatpush.msra.mxu0 %v98
  %203 = vmatmul.f32.gmra.mxu0 %v80
  %v204 = vpop.f32.mrf.mxu0
  %v205 = vadd.f32 %v52, %v204
  %206 = vmatmul.f32.gmra.mxu0 %v83
  %v207 = vpop.f32.mrf.mxu0
  %v208 = vadd.f32 %v57, %v207
  %209 = vmatmul.f32.gmra.mxu0 %v86
  %v210 = vpop.f32.mrf.mxu0
  %v211 = vadd.f32 %v62, %v210
  %212 = vmatmul.f32.gmra.mxu0 %v89
  %v213 = vpop.f32.mrf.mxu0
  %v214 = vadd.f32 %v67, %v213
  %215 = vdwg.mxu0
  %v216 = vmax.f32 %v118, 0.0
  %v217 = vmax.f32 %v147, 0.0
  %v218 = vmax.f32 %v176, 0.0
  %v219 = vmax.f32 %v205, 0.0
  %v220 = vmax.f32 %v121, 0.0
  %v221 = vmax.f32 %v150, 0.0
  %v222 = vmax.f32 %v179, 0.0
  %v223 = vmax.f32 %v208, 0.0
  %v224 = vmax.f32 %v124, 0.0
  %v225 = vmax.f32 %v153, 0.0
  %v226 = vmax.f32 %v182, 0.0
  %v227 = vmax.f32 %v211, 0.0
  %v228 = vmax.f32 %v127, 0.0
  %v229 = vmax.f32 %v156, 0.0
  %v230 = vmax.f32 %v185, 0.0
  %v231 = vmax.f32 %v214, 0.0
  %v232 = vld [vmem:[%s4] sm:$0xf]
  %v233 = vld [vmem:[%s5] sm:$0xf]
  %235 = vset.pattern.permute.xlu0 0
  %236 = vperm.xlu0 %235, %v233
  %v237 = vpop.permute.xlu0 %236
  %vm239 = vcmask 261120
  %v241 = vsel %vm239, %v232, 0
  %243 = vmatpush.msra.mxu0 0.0
  %244 = vmatpush.msra.mxu0 0.0
  %245 = vmatpush.msra.mxu0 0.0
  %246 = vmatpush.msra.mxu0 0.0
  %247 = vmatpush.msra.mxu0 0.0
  %248 = vmatpush.msra.mxu0 0.0
  %249 = vmatpush.msra.mxu0 0.0
  %250 = vmatpush.msra.mxu0 0.0
  %251 = vmatpush.msra.mxu0 0.0
  %252 = vmatpush.msra.mxu0 0.0
  %253 = vmatpush.msra.mxu0 0.0
  %254 = vmatpush.msra.mxu0 0.0
  %255 = vmatpush.msra.mxu0 %v228
  %256 = vmatpush.msra.mxu0 %v224
  %257 = vmatpush.msra.mxu0 %v220
  %258 = vmatpush.msra.mxu0 %v216
  %259 = vmatmul.f32.gmra.mxu0 %v241
  %v260 = vpop.f32.mrf.mxu0
  %v261 = vadd.f32 %v237, %v260
  %262 = vdwg.mxu0
  %263 = vmatpush.msra.mxu0 0.0
  %264 = vmatpush.msra.mxu0 0.0
  %265 = vmatpush.msra.mxu0 0.0
  %266 = vmatpush.msra.mxu0 0.0
  %267 = vmatpush.msra.mxu0 0.0
  %268 = vmatpush.msra.mxu0 0.0
  %269 = vmatpush.msra.mxu0 0.0
  %270 = vmatpush.msra.mxu0 0.0
  %271 = vmatpush.msra.mxu0 0.0
  %272 = vmatpush.msra.mxu0 0.0
  %273 = vmatpush.msra.mxu0 0.0
  %274 = vmatpush.msra.mxu0 0.0
  %275 = vmatpush.msra.mxu0 %v229
  %276 = vmatpush.msra.mxu0 %v225
  %277 = vmatpush.msra.mxu0 %v221
  %278 = vmatpush.msra.mxu0 %v217
  %279 = vmatmul.f32.gmra.mxu0 %v241
  %v280 = vpop.f32.mrf.mxu0
  %v281 = vadd.f32 %v237, %v280
  %282 = vdwg.mxu0
  %283 = vmatpush.msra.mxu0 0.0
  %284 = vmatpush.msra.mxu0 0.0
  %285 = vmatpush.msra.mxu0 0.0
  %286 = vmatpush.msra.mxu0 0.0
  %287 = vmatpush.msra.mxu0 0.0
  %288 = vmatpush.msra.mxu0 0.0
  %289 = vmatpush.msra.mxu0 0.0
  %290 = vmatpush.msra.mxu0 0.0
  %291 = vmatpush.msra.mxu0 0.0
  %292 = vmatpush.msra.mxu0 0.0
  %293 = vmatpush.msra.mxu0 0.0
  %294 = vmatpush.msra.mxu0 0.0
  %295 = vmatpush.msra.mxu0 %v230
  %296 = vmatpush.msra.mxu0 %v226
  %297 = vmatpush.msra.mxu0 %v222
  %298 = vmatpush.msra.mxu0 %v218
  %299 = vmatmul.f32.gmra.mxu0 %v241
  %v300 = vpop.f32.mrf.mxu0
  %v301 = vadd.f32 %v237, %v300
  %302 = vdwg.mxu0
  %303 = vmatpush.msra.mxu0 0.0
  %304 = vmatpush.msra.mxu0 0.0
  %305 = vmatpush.msra.mxu0 0.0
  %306 = vmatpush.msra.mxu0 0.0
  %307 = vmatpush.msra.mxu0 0.0
  %308 = vmatpush.msra.mxu0 0.0
  %309 = vmatpush.msra.mxu0 0.0
  %310 = vmatpush.msra.mxu0 0.0
  %311 = vmatpush.msra.mxu0 0.0
  %312 = vmatpush.msra.mxu0 0.0
  %313 = vmatpush.msra.mxu0 0.0
  %314 = vmatpush.msra.mxu0 0.0
  %315 = vmatpush.msra.mxu0 %v231
  %316 = vmatpush.msra.mxu0 %v227
  %317 = vmatpush.msra.mxu0 %v223
  %318 = vmatpush.msra.mxu0 %v219
  %319 = vmatmul.f32.gmra.mxu0 %v241
  %v320 = vpop.f32.mrf.mxu0
  %v321 = vadd.f32 %v237, %v320
  %322 = vdwg.mxu0
  %327 = vst.sshfl [vmem:[#allocation1] sm:$0xff pattern:$0x73625140] %v261
  %328 = vst.sshfl [vmem:[#allocation1 + $0x8] sm:$0xff pattern:$0x73625140] %v281
  %329 = vst.sshfl [vmem:[#allocation1 + $0x10] sm:$0xff pattern:$0x73625140] %v301
  %330 = vst.sshfl [vmem:[#allocation1 + $0x18] sm:$0xff pattern:$0x73625140] %v321
  %s331 = scalar_lea.vmem [#allocation1], 1
  %v332 = vld [vmem:[%s331] ss:$4 sm:$0xff]
  %334 = vst [vmem:[%s10] sm:$0xff] %v332
  %335 = vst [vmem:[#allocation1] sm:$0xff] %v261
  %336 = vst [vmem:[#allocation1 + $0x9] sm:$0xff] %v281
  %337 = vst [vmem:[#allocation1 + $0x12] sm:$0xff] %v301
  %338 = vst [vmem:[#allocation1 + $0x1b] sm:$0xff] %v321
  %s339 = scalar_lea.vmem [#allocation1], 3
  %v340 = vld [vmem:[%s339] ss:$9 sm:$0xff]
  %v342 = vlaneseq
  %vm343 = vcmp.ge.s32.totalorder %v342, 0
  %vm344 = vcmp.lt.s32.totalorder %v342, 512
  %vm345 = vmand %vm343, %vm344
  %346 = vst.msk [vmem:[%s12] ss:$2 sm:$0xf] %vm345, %v340
  %347 = vst [vmem:[#allocation1] sm:$0xff] %v261
  %348 = vst [vmem:[#allocation1 + $0x9] sm:$0xff] %v281
  %349 = vst [vmem:[#allocation1 + $0x12] sm:$0xff] %v301
  %350 = vst [vmem:[#allocation1 + $0x1b] sm:$0xff] %v321
  %s351 = scalar_lea.vmem [#allocation1], 2
  %v352 = vld [vmem:[%s351] ss:$9 sm:$0xff]
  %s354 = scalar_lea.vmem %s12, 1
  %355 = vst.msk [vmem:[%s354] ss:$2 sm:$0xf] %vm345, %v352
  %v356 = vrot.slane %v39, 3
  %v357 = vrot.slane %v40, 6
  %v358 = vrot.slane %v40, 1
  %vm359 = vcmask 1040384
  %v360 = vsel %vm359, %v39, %v356
  %vm361 = vcmask 1042434
  %v362 = vsel %vm361, %v357, %v358
  %vm363 = vcmask 1041408
  %v364 = vsel %vm363, %v360, %v362
  %366 = vst.msk [vmem:[#allocation2] ss:$4 sm:$0xf] %vm345, %v364
  %367 = vst [vmem:[#allocation1] sm:$0xff] %v261
  %368 = vst [vmem:[#allocation1 + $0x9] sm:$0xff] %v281
  %369 = vst [vmem:[#allocation1 + $0x12] sm:$0xff] %v301
  %370 = vst [vmem:[#allocation1 + $0x1b] sm:$0xff] %v321
  %s371 = scalar_lea.vmem [#allocation1], 3
  %v372 = vld [vmem:[%s371] ss:$9 sm:$0xff]
  %s374 = scalar_lea.vmem [#allocation2], 1
  %375 = vst.msk [vmem:[%s374] ss:$4 sm:$0xf] %vm345, %v372
  %376 = vst [vmem:[#allocation1] sm:$0xff] %v261
  %377 = vst [vmem:[#allocation1 + $0x9] sm:$0xff] %v281
  %378 = vst [vmem:[#allocation1 + $0x12] sm:$0xff] %v301
  %379 = vst [vmem:[#allocation1 + $0x1b] sm:$0xff] %v321
  %s380 = scalar_lea.vmem [#allocation1], 2
  %v381 = vld [vmem:[%s380] ss:$9 sm:$0xff]
  %s383 = scalar_lea.vmem [#allocation2], 2
  %384 = vst.msk [vmem:[%s383] ss:$4 sm:$0xf] %vm345, %v381
  %v385 = vld [vmem:[#allocation2] sm:$0x77]
  %v386 = vld [vmem:[#allocation2 + $0x8] sm:$0x77]
  %v387 = vld [vmem:[%s6] sm:$0xff]
  %v388 = vld [vmem:[%s6 + $0x8] sm:$0xff]
  %v389 = vld [vmem:[%s6 + $0x10] sm:$0xff]
  %v390 = vld [vmem:[%s6 + $0x18] sm:$0xff]
  %v391 = vld [vmem:[%s7] sm:$0xff]
  %v392 = vld [vmem:[%s7 + $0x8] sm:$0xff]
  %v393 = vld [vmem:[%s7 + $0x10] sm:$0xff]
  %v394 = vld [vmem:[%s7 + $0x18] sm:$0xff]
  %396 = vset.pattern.permute.xlu0 0
  %397 = vperm.xlu0 %396, %v391
  %v398 = vpop.permute.xlu0 %397
  %401 = vset.pattern.permute.xlu0 0
  %402 = vperm.xlu0 %401, %v392
  %v403 = vpop.permute.xlu0 %402
  %406 = vset.pattern.permute.xlu0 0
  %407 = vperm.xlu0 %406, %v393
  %v408 = vpop.permute.xlu0 %407
  %411 = vset.pattern.permute.xlu0 0
  %412 = vperm.xlu0 %411, %v394
  %v413 = vpop.permute.xlu0 %412
  %417 = vst [vmem:[#allocation1] ss:$2 sm:$0xff] %v385
  %s418 = scalar_lea.vmem [#allocation1], 16
  %419 = vst [vmem:[%s418] ss:$2 sm:$0xff] %v386
  %v420 = vld.sshfl [vmem:[#allocation1] sm:$0xff pattern:$0x75316420]
  %v421 = vld.sshfl [vmem:[#allocation1 + $0x8] sm:$0xff pattern:$0x75316420]
  %v422 = vld.sshfl [vmem:[#allocation1 + $0x10] sm:$0xff pattern:$0x75316420]
  %v423 = vld.sshfl [vmem:[#allocation1 + $0x18] sm:$0xff pattern:$0x75316420]
  %v425 = vsel %vm78, %v387, 0
  %v428 = vsel %vm78, %v388, 0
  %v431 = vsel %vm78, %v389, 0
  %v434 = vsel %vm78, %v390, 0
  %v436 = vsel %vm91, %v420, 0
  %v438 = vsel %vm91, %v421, 0
  %v440 = vsel %vm91, %v422, 0
  %v442 = vsel %vm91, %v423, 0
  %444 = vmatpush.msra.mxu0 0.0
  %445 = vmatpush.msra.mxu0 0.0
  %446 = vmatpush.msra.mxu0 0.0
  %447 = vmatpush.msra.mxu0 0.0
  %448 = vmatpush.msra.mxu0 0.0
  %449 = vmatpush.msra.mxu0 0.0
  %450 = vmatpush.msra.mxu0 0.0
  %451 = vmatpush.msra.mxu0 0.0
  %452 = vmatpush.msra.mxu0 0.0
  %453 = vmatpush.msra.mxu0 0.0
  %454 = vmatpush.msra.mxu0 0.0
  %455 = vmatpush.msra.mxu0 0.0
  %456 = vmatpush.msra.mxu0 0.0
  %457 = vmatpush.msra.mxu0 0.0
  %458 = vmatpush.msra.mxu0 0.0
  %459 = vmatpush.msra.mxu0 %v436
  %460 = vmatmul.f32.gmra.mxu0 %v425
  %v461 = vpop.f32.mrf.mxu0
  %v462 = vadd.f32 %v398, %v461
  %463 = vmatmul.f32.gmra.mxu0 %v428
  %v464 = vpop.f32.mrf.mxu0
  %v465 = vadd.f32 %v403, %v464
  %466 = vmatmul.f32.gmra.mxu0 %v431
  %v467 = vpop.f32.mrf.mxu0
  %v468 = vadd.f32 %v408, %v467
  %469 = vmatmul.f32.gmra.mxu0 %v434
  %v470 = vpop.f32.mrf.mxu0
  %v471 = vadd.f32 %v413, %v470
  %472 = vdwg.mxu0
  %473 = vmatpush.msra.mxu0 0.0
  %474 = vmatpush.msra.mxu0 0.0
  %475 = vmatpush.msra.mxu0 0.0
  %476 = vmatpush.msra.mxu0 0.0
  %477 = vmatpush.msra.mxu0 0.0
  %478 = vmatpush.msra.mxu0 0.0
  %479 = vmatpush.msra.mxu0 0.0
  %480 = vmatpush.msra.mxu0 0.0
  %481 = vmatpush.msra.mxu0 0.0
  %482 = vmatpush.msra.mxu0 0.0
  %483 = vmatpush.msra.mxu0 0.0
  %484 = vmatpush.msra.mxu0 0.0
  %485 = vmatpush.msra.mxu0 0.0
  %486 = vmatpush.msra.mxu0 0.0
  %487 = vmatpush.msra.mxu0 0.0
  %488 = vmatpush.msra.mxu0 %v438
  %489 = vmatmul.f32.gmra.mxu0 %v425
  %v490 = vpop.f32.mrf.mxu0
  %v491 = vadd.f32 %v398, %v490
  %492 = vmatmul.f32.gmra.mxu0 %v428
  %v493 = vpop.f32.mrf.mxu0
  %v494 = vadd.f32 %v403, %v493
  %495 = vmatmul.f32.gmra.mxu0 %v431
  %v496 = vpop.f32.mrf.mxu0
  %v497 = vadd.f32 %v408, %v496
  %498 = vmatmul.f32.gmra.mxu0 %v434
  %v499 = vpop.f32.mrf.mxu0
  %v500 = vadd.f32 %v413, %v499
  %501 = vdwg.mxu0
  %502 = vmatpush.msra.mxu0 0.0
  %503 = vmatpush.msra.mxu0 0.0
  %504 = vmatpush.msra.mxu0 0.0
  %505 = vmatpush.msra.mxu0 0.0
  %506 = vmatpush.msra.mxu0 0.0
  %507 = vmatpush.msra.mxu0 0.0
  %508 = vmatpush.msra.mxu0 0.0
  %509 = vmatpush.msra.mxu0 0.0
  %510 = vmatpush.msra.mxu0 0.0
  %511 = vmatpush.msra.mxu0 0.0
  %512 = vmatpush.msra.mxu0 0.0
  %513 = vmatpush.msra.mxu0 0.0
  %514 = vmatpush.msra.mxu0 0.0
  %515 = vmatpush.msra.mxu0 0.0
  %516 = vmatpush.msra.mxu0 0.0
  %517 = vmatpush.msra.mxu0 %v440
  %518 = vmatmul.f32.gmra.mxu0 %v425
  %v519 = vpop.f32.mrf.mxu0
  %v520 = vadd.f32 %v398, %v519
  %521 = vmatmul.f32.gmra.mxu0 %v428
  %v522 = vpop.f32.mrf.mxu0
  %v523 = vadd.f32 %v403, %v522
  %524 = vmatmul.f32.gmra.mxu0 %v431
  %v525 = vpop.f32.mrf.mxu0
  %v526 = vadd.f32 %v408, %v525
  %527 = vmatmul.f32.gmra.mxu0 %v434
  %v528 = vpop.f32.mrf.mxu0
  %v529 = vadd.f32 %v413, %v528
  %530 = vdwg.mxu0
  %531 = vmatpush.msra.mxu0 0.0
  %532 = vmatpush.msra.mxu0 0.0
  %533 = vmatpush.msra.mxu0 0.0
  %534 = vmatpush.msra.mxu0 0.0
  %535 = vmatpush.msra.mxu0 0.0
  %536 = vmatpush.msra.mxu0 0.0
  %537 = vmatpush.msra.mxu0 0.0
  %538 = vmatpush.msra.mxu0 0.0
  %539 = vmatpush.msra.mxu0 0.0
  %540 = vmatpush.msra.mxu0 0.0
  %541 = vmatpush.msra.mxu0 0.0
  %542 = vmatpush.msra.mxu0 0.0
  %543 = vmatpush.msra.mxu0 0.0
  %544 = vmatpush.msra.mxu0 0.0
  %545 = vmatpush.msra.mxu0 0.0
  %546 = vmatpush.msra.mxu0 %v442
  %547 = vmatmul.f32.gmra.mxu0 %v425
  %v548 = vpop.f32.mrf.mxu0
  %v549 = vadd.f32 %v398, %v548
  %550 = vmatmul.f32.gmra.mxu0 %v428
  %v551 = vpop.f32.mrf.mxu0
  %v552 = vadd.f32 %v403, %v551
  %553 = vmatmul.f32.gmra.mxu0 %v431
  %v554 = vpop.f32.mrf.mxu0
  %v555 = vadd.f32 %v408, %v554
  %556 = vmatmul.f32.gmra.mxu0 %v434
  %v557 = vpop.f32.mrf.mxu0
  %v558 = vadd.f32 %v413, %v557
  %559 = vdwg.mxu0
  %v560 = vmax.f32 %v462, 0.0
  %v561 = vmax.f32 %v491, 0.0
  %v562 = vmax.f32 %v520, 0.0
  %v563 = vmax.f32 %v549, 0.0
  %v564 = vmax.f32 %v465, 0.0
  %v565 = vmax.f32 %v494, 0.0
  %v566 = vmax.f32 %v523, 0.0
  %v567 = vmax.f32 %v552, 0.0
  %v568 = vmax.f32 %v468, 0.0
  %v569 = vmax.f32 %v497, 0.0
  %v570 = vmax.f32 %v526, 0.0
  %v571 = vmax.f32 %v555, 0.0
  %v572 = vmax.f32 %v471, 0.0
  %v573 = vmax.f32 %v500, 0.0
  %v574 = vmax.f32 %v529, 0.0
  %v575 = vmax.f32 %v558, 0.0
  %v576 = vld [vmem:[%s8] sm:$0xf]
  %v577 = vld [vmem:[%s9] sm:$0xf]
  %579 = vset.pattern.permute.xlu0 0
  %580 = vperm.xlu0 %579, %v577
  %v581 = vpop.permute.xlu0 %580
  %v584 = vsel %vm239, %v576, 0
  %586 = vmatpush.msra.mxu0 0.0
  %587 = vmatpush.msra.mxu0 0.0
  %588 = vmatpush.msra.mxu0 0.0
  %589 = vmatpush.msra.mxu0 0.0
  %590 = vmatpush.msra.mxu0 0.0
  %591 = vmatpush.msra.mxu0 0.0
  %592 = vmatpush.msra.mxu0 0.0
  %593 = vmatpush.msra.mxu0 0.0
  %594 = vmatpush.msra.mxu0 0.0
  %595 = vmatpush.msra.mxu0 0.0
  %596 = vmatpush.msra.mxu0 0.0
  %597 = vmatpush.msra.mxu0 0.0
  %598 = vmatpush.msra.mxu0 %v572
  %599 = vmatpush.msra.mxu0 %v568
  %600 = vmatpush.msra.mxu0 %v564
  %601 = vmatpush.msra.mxu0 %v560
  %602 = vmatmul.f32.gmra.mxu0 %v584
  %v603 = vpop.f32.mrf.mxu0
  %v604 = vadd.f32 %v581, %v603
  %605 = vdwg.mxu0
  %606 = vmatpush.msra.mxu0 0.0
  %607 = vmatpush.msra.mxu0 0.0
  %608 = vmatpush.msra.mxu0 0.0
  %609 = vmatpush.msra.mxu0 0.0
  %610 = vmatpush.msra.mxu0 0.0
  %611 = vmatpush.msra.mxu0 0.0
  %612 = vmatpush.msra.mxu0 0.0
  %613 = vmatpush.msra.mxu0 0.0
  %614 = vmatpush.msra.mxu0 0.0
  %615 = vmatpush.msra.mxu0 0.0
  %616 = vmatpush.msra.mxu0 0.0
  %617 = vmatpush.msra.mxu0 0.0
  %618 = vmatpush.msra.mxu0 %v573
  %619 = vmatpush.msra.mxu0 %v569
  %620 = vmatpush.msra.mxu0 %v565
  %621 = vmatpush.msra.mxu0 %v561
  %622 = vmatmul.f32.gmra.mxu0 %v584
  %v623 = vpop.f32.mrf.mxu0
  %v624 = vadd.f32 %v581, %v623
  %625 = vdwg.mxu0
  %626 = vmatpush.msra.mxu0 0.0
  %627 = vmatpush.msra.mxu0 0.0
  %628 = vmatpush.msra.mxu0 0.0
  %629 = vmatpush.msra.mxu0 0.0
  %630 = vmatpush.msra.mxu0 0.0
  %631 = vmatpush.msra.mxu0 0.0
  %632 = vmatpush.msra.mxu0 0.0
  %633 = vmatpush.msra.mxu0 0.0
  %634 = vmatpush.msra.mxu0 0.0
  %635 = vmatpush.msra.mxu0 0.0
  %636 = vmatpush.msra.mxu0 0.0
  %637 = vmatpush.msra.mxu0 0.0
  %638 = vmatpush.msra.mxu0 %v574
  %639 = vmatpush.msra.mxu0 %v570
  %640 = vmatpush.msra.mxu0 %v566
  %641 = vmatpush.msra.mxu0 %v562
  %642 = vmatmul.f32.gmra.mxu0 %v584
  %v643 = vpop.f32.mrf.mxu0
  %v644 = vadd.f32 %v581, %v643
  %645 = vdwg.mxu0
  %646 = vmatpush.msra.mxu0 0.0
  %647 = vmatpush.msra.mxu0 0.0
  %648 = vmatpush.msra.mxu0 0.0
  %649 = vmatpush.msra.mxu0 0.0
  %650 = vmatpush.msra.mxu0 0.0
  %651 = vmatpush.msra.mxu0 0.0
  %652 = vmatpush.msra.mxu0 0.0
  %653 = vmatpush.msra.mxu0 0.0
  %654 = vmatpush.msra.mxu0 0.0
  %655 = vmatpush.msra.mxu0 0.0
  %656 = vmatpush.msra.mxu0 0.0
  %657 = vmatpush.msra.mxu0 0.0
  %658 = vmatpush.msra.mxu0 %v575
  %659 = vmatpush.msra.mxu0 %v571
  %660 = vmatpush.msra.mxu0 %v567
  %661 = vmatpush.msra.mxu0 %v563
  %662 = vmatmul.f32.gmra.mxu0 %v584
  %v663 = vpop.f32.mrf.mxu0
  %v664 = vadd.f32 %v581, %v663
  %665 = vdwg.mxu0
  %670 = vst.sshfl [vmem:[#allocation1] sm:$0xff pattern:$0x73625140] %v604
  %671 = vst.sshfl [vmem:[#allocation1 + $0x8] sm:$0xff pattern:$0x73625140] %v624
  %672 = vst.sshfl [vmem:[#allocation1 + $0x10] sm:$0xff pattern:$0x73625140] %v644
  %673 = vst.sshfl [vmem:[#allocation1 + $0x18] sm:$0xff pattern:$0x73625140] %v664
  %s674 = scalar_lea.vmem [#allocation1], 1
  %v675 = vld [vmem:[%s674] ss:$4 sm:$0xff]
  %677 = vst [vmem:[%s11] sm:$0xff] %v675
  %v678 = vmul.f32 %v261, %v604
  %v679 = vmul.f32 %v281, %v624
  %v680 = vmul.f32 %v301, %v644
  %v681 = vmul.f32 %v321, %v664
  %v686 = vrot.slane %v678, 1
  %v687 = vrot.slane %v679, 1
  %v688 = vrot.slane %v680, 1
  %v689 = vrot.slane %v681, 1
  %v694 = vsub.f32 %v678, %v686
  %v695 = vsub.f32 %v679, %v687
  %v696 = vsub.f32 %v680, %v688
  %v697 = vsub.f32 %v681, %v689
  %702 = vst [vmem:[#allocation1] sm:$0xff] %v694
  %703 = vst [vmem:[#allocation1 + $0x9] sm:$0xff] %v695
  %704 = vst [vmem:[#allocation1 + $0x12] sm:$0xff] %v696
  %705 = vst [vmem:[#allocation1 + $0x1b] sm:$0xff] %v697
  %s706 = scalar_lea.vmem [#allocation1], 2
  %v707 = vld [vmem:[%s706] ss:$9 sm:$0xff]
  %709 = vst.msk [vmem:[%s13] sm:$0xf] %vm345, %v707
  // Predicated region
  $region42: #{_dual_predictor_core.1} parent=0 // pred_check
    _
  $region43: #{_dual_predictor_core.1} parent=0 // pred_check_branch
    %711 = sbr.rel (0) target = $region45
  $region44: #{_dual_predictor_core.1} parent=0 // pred_region
    _
  $region45: #{_dual_predictor_core.1} parent=0 // pred_fallthru
    _
  // Predicated region
  $region46: #{_dual_predictor_core.1} parent=0 // pred_check
    _
  $region47: #{_dual_predictor_core.1} parent=0 // pred_check_branch
    %713 = sbr.rel (0) target = $region49
  $region48: #{_dual_predictor_core.1} parent=0 // pred_region
    _
  $region49: #{_dual_predictor_core.1} parent=0 // pred_fallthru
    _
  // Predicated region
  $region50: #{_dual_predictor_core.1} parent=0 // pred_check
    _
  $region51: #{_dual_predictor_core.1} parent=0 // pred_check_branch
    %715 = sbr.rel (0) target = $region53
  $region52: #{_dual_predictor_core.1} parent=0 // pred_region
    _
  $region53: #{_dual_predictor_core.1} parent=0 // pred_fallthru
    _
  // Predicated region
  $region54: #{_dual_predictor_core.1} parent=0 // pred_check
    _
  $region55: #{_dual_predictor_core.1} parent=0 // pred_check_branch
    %717 = sbr.rel (0) target = $region57
  $region56: #{_dual_predictor_core.1} parent=0 // pred_region
    _
  $region57: #{_dual_predictor_core.1} parent=0 // pred_fallthru
    _
  // Predicated region
  $region58: #{_dual_predictor_core.1} parent=0 // pred_check
    _
  $region59: #{_dual_predictor_core.1} parent=0 // pred_check_branch
    %719 = sbr.rel (0) target = $region61
  $region60: #{_dual_predictor_core.1} parent=0 // pred_region
    _
  $region61: #{_dual_predictor_core.1} parent=0 // pred_fallthru
    _
  // Predicated region
  $region62: #{_dual_predictor_core.1} parent=0 // pred_check
    _
  $region63: #{_dual_predictor_core.1} parent=0 // pred_check_branch
    %721 = sbr.rel (0) target = $region65
  $region64: #{_dual_predictor_core.1} parent=0 // pred_region
    _
  $region65: #{_dual_predictor_core.1} parent=0 // pred_fallthru
    _
  // Predicated region
  $region66: #{_dual_predictor_core.1} parent=0 // pred_check
    _
  $region67: #{_dual_predictor_core.1} parent=0 // pred_check_branch
    %723 = sbr.rel (0) target = $region69
  $region68: #{_dual_predictor_core.1} parent=0 // pred_region
    _
  $region69: #{_dual_predictor_core.1} parent=0 // pred_fallthru
    _
  // Predicated region
  $region70: #{_dual_predictor_core.1} parent=0 // pred_check
    _
  $region71: #{_dual_predictor_core.1} parent=0 // pred_check_branch
    %725 = sbr.rel (0) target = $region73
  $region72: #{_dual_predictor_core.1} parent=0 // pred_region
    _
  $region73: #{_dual_predictor_core.1} parent=0 // pred_fallthru
    _

</llo_original>
